<compile_context>
chip_gen: v7x
topology: tpu7x:2x2x1
jax: 0.10.0
libtpu: 0.0.40
codegen_flags: <defaults>
</compile_context>

<pallas_src>
import functools

import jax
import jax.numpy as jnp
from jax.experimental import pallas as pl
from jax.experimental.pallas import tpu as pltpu


# ----------------------------- Pallas kernel ------------------------------- #

def fused_input_conv_kernel(x_ref, sb_ref, w1_ref, w2_ref, o_ref,
                            xp1_ref, xp2_ref, *, NB, H, W, Cin, Cout):
    # x_ref : (NB, H, W*Cin)      row-packed input block (NB batch elements)
    # sb_ref: (6, max(W*Cin,W*Cout)) packed BN scale/shift rows
    #         [s0, b0, s1, b1, s2, b2]
    # w1_ref: (3, W*Cin,  W*Cout) banded conv1 weights (bf16, h-pad baked in)
    # w2_ref: (3, W*Cout, W*Cout) banded conv2 weights (bf16)
    # o_ref : (NB, H, W*Cout)     lane-dense output block
    # xp1/xp2: vertically padded f32 VMEM scratch, NB*(H+2) rows each
    WCi, WCo = W * Cin, W * Cout
    HP = H + 2                    # rows per padded batch block
    M = NB * HP - 2               # stacked matmul M dimension

    # Only the halo rows need to be zero; interiors are rewritten below.
    for b in range(NB):
        xp1_ref[b * HP:b * HP + 1, :] = jnp.zeros((1, WCi), jnp.float32)
        xp1_ref[b * HP + H + 1:b * HP + H + 2, :] = jnp.zeros((1, WCi), jnp.float32)
        xp2_ref[b * HP:b * HP + 1, :] = jnp.zeros((1, WCo), jnp.float32)
        xp2_ref[b * HP + H + 1:b * HP + H + 2, :] = jnp.zeros((1, WCo), jnp.float32)

    s0 = sb_ref[0:1, :WCi]
    b0 = sb_ref[1:2, :WCi]
    s1 = sb_ref[2:3, :WCo]
    b1 = sb_ref[3:4, :WCo]
    s2 = sb_ref[4:5, :WCo]
    b2 = sb_ref[5:6, :WCo]

    # 1) input BatchNorm (eval-mode affine, f32 VPU) into the interior rows.
    for b in range(NB):
        xp1_ref[b * HP + 1:b * HP + 1 + H, :] = x_ref[b] * s0 + b0

    # 2) conv1 (3x3 SAME): 3 row-shifted lane-dense matmuls, bf16 MXU operands,
    #    f32 accumulation; acc initialized from the dy=0 matmul.
    xp1 = xp1_ref[...].astype(jnp.bfloat16)
    acc = jnp.dot(xp1[0:M, :], w1_ref[0], preferred_element_type=jnp.float32)
    for dy in range(1, 3):
        acc = acc + jnp.dot(xp1[dy:dy + M, :], w1_ref[dy],
                            preferred_element_type=jnp.float32)
    y1 = jnp.maximum(acc * s1 + b1, 0.0)          # BN1 + ReLU (f32)

    # 3) interior rows of conv2's padded input (the junk batch-boundary rows of
    #    the stacked acc are skipped; halos stay zero).
    for b in range(NB):
        xp2_ref[b * HP + 1:b * HP + 1 + H, :] = y1[b * HP:b * HP + H, :]

    # 4) conv2 (3x3 SAME) + BN2 + ReLU, per-batch lane-dense stores.
    xp2 = xp2_ref[...].astype(jnp.bfloat16)
    acc2 = jnp.dot(xp2[0:M, :], w2_ref[0], preferred_element_type=jnp.float32)
    for dy in range(1, 3):
        acc2 = acc2 + jnp.dot(xp2[dy:dy + M, :], w2_ref[dy],
                              preferred_element_type=jnp.float32)
    out = jnp.maximum(acc2 * s2 + b2, 0.0)
    for b in range(NB):
        o_ref[b] = out[b * HP:b * HP + H, :].astype(o_ref.dtype)


# ------------------------------- wrappers ----------------------------------- #

def fold_bn(gamma, beta, mean, var, conv_bias=None, eps=1e-5):
    """Fold (optional conv bias) + BatchNorm (eval mode) into scale/shift."""
    s = gamma / jnp.sqrt(var + eps)
    b = beta - mean * s
    if conv_bias is not None:
        b = b + conv_bias * s
    return s.astype(jnp.float32), b.astype(jnp.float32)


def build_banded_weights(w_oihw, W):
    """(Cout, Cin, 3, 3) OIHW -> (3, W*Cin, W*Cout) banded row-conv matrices.

    The horizontal SAME padding is baked in: edge dx taps that fall off the
    image are clipped, so the kernel input rows need no column padding and
    out_row(h) = sum_dy vpad_row(h+dy) @ band[dy].  Built at trace time (tiny).
    """
    Cout, Cin, kh, kw = w_oihw.shape
    hwio = jnp.transpose(w_oihw, (2, 3, 1, 0)).astype(jnp.float32)  # (3,3,Cin,Cout)
    blk = hwio.reshape(kh, kw * Cin, Cout)
    band = jnp.zeros((kh, (W + kw - 1) * Cin, W * Cout), jnp.float32)
    for w in range(W):
        band = band.at[:, w * Cin:(w + kw) * Cin,
                       w * Cout:(w + 1) * Cout].set(blk)
    # Drop the left/right padded input columns (their taps read zeros anyway).
    return band[:, Cin:(W + 1) * Cin, :]


def _pick_batch_block(N, H):
    """Largest NB (divisor of N) with NB*(H+2) <= 128 (keeps acc/y1 in vregs),
    preferring >=2 grid steps so a megacore (v7x) keeps both TCs busy."""
    cap = max(1, 128 // (H + 2))
    divs = [d for d in range(1, N + 1) if N % d == 0 and d <= cap]
    two_step = [d for d in divs if N // d >= 2]
    return max(two_step) if two_step else max(divs)


def input_conv_forward_packed(x_packed, params, *, H, W):
    """Fused forward on the row-packed layout (N, H, W*Cin) -> (N, H, W*Cout).

    Using this entry point end-to-end avoids the NCHW<->NHWC HBM transposes."""
    N = x_packed.shape[0]
    Cin = x_packed.shape[-1] // W
    Cout = params["w1"].shape[0]
    WCi, WCo = W * Cin, W * Cout
    WC = max(WCi, WCo)

    s0, b0 = fold_bn(**params["bn0"])
    s1, b1 = fold_bn(**params["bn1"], conv_bias=params["b1"])
    s2, b2 = fold_bn(**params["bn2"], conv_bias=params["b2"])

    def _row(v):
        t = jnp.tile(v, W)
        return jnp.pad(t, (0, WC - t.shape[0]))

    # Six per-channel affines packed into ONE small VMEM input (f32).
    sb = jnp.stack([_row(s0), _row(b0), _row(s1), _row(b1), _row(s2), _row(b2)])

    # bf16 banded weights: MXU-native operands, half the VMEM / DMA bytes.
    w1b = build_banded_weights(params["w1"], W).astype(jnp.bfloat16)
    w2b = build_banded_weights(params["w2"], W).astype(jnp.bfloat16)

    NB = _pick_batch_block(N, H)
    kern = functools.partial(fused_input_conv_kernel,
                             NB=NB, H=H, W=W, Cin=Cin, Cout=Cout)

    return pl.pallas_call(
        kern,
        out_shape=jax.ShapeDtypeStruct((N, H, WCo), jnp.float32),
        grid=(N // NB,),
        in_specs=[
            pl.BlockSpec((NB, H, WCi), lambda n: (n, 0, 0)),
            pl.BlockSpec((6, WC), lambda n: (0, 0)),
            pl.BlockSpec((3, WCi, WCo), lambda n: (0, 0, 0)),
            pl.BlockSpec((3, WCo, WCo), lambda n: (0, 0, 0)),
        ],
        out_specs=pl.BlockSpec((NB, H, WCo), lambda n: (n, 0, 0)),
        scratch_shapes=[
            pltpu.VMEM((NB * (H + 2), WCi), jnp.float32),
            pltpu.VMEM((NB * (H + 2), WCo), jnp.float32),
        ],
        compiler_params=pltpu.CompilerParams(
            dimension_semantics=("parallel",),
            vmem_limit_bytes=32 * 1024 * 1024),
    )(x_packed, sb, w1b, w2b)


def input_conv_forward(x_nchw, params):
    """InputConv.forward — PyTorch NCHW in/out (transposes only at the edges)."""
    N, Cin, H, W = x_nchw.shape
    Cout = params["w1"].shape[0]
    x = jnp.transpose(x_nchw, (0, 2, 3, 1)).astype(jnp.float32)
    x = x.reshape(N, H, W * Cin)
    out = input_conv_forward_packed(x, params, H=H, W=W)
    out = out.reshape(N, H, W, Cout)
    return jnp.transpose(out, (0, 3, 1, 2))                      # -> NCHW


# --------------------------------- params ----------------------------------- #

def init_params(key, c_in, c_out):
    ks = jax.random.split(key, 16)
    p = {}
    # input BatchNorm2d(c_in)
    p["bn0"] = dict(
        gamma=jax.random.uniform(ks[0], (c_in,), minval=0.5, maxval=1.5),
        beta=0.1 * jax.random.normal(ks[1], (c_in,)),
        mean=0.1 * jax.random.normal(ks[2], (c_in,)),
        var=jax.random.uniform(ks[3], (c_in,), minval=0.5, maxval=1.5))
    # ConvBlock 1: Conv2d(c_in, c_out, 3, padding=1) + BatchNorm2d(c_out)
    p["w1"] = 0.1 * jax.random.normal(ks[4], (c_out, c_in, 3, 3))   # OIHW
    p["b1"] = 0.05 * jax.random.normal(ks[5], (c_out,))
    p["bn1"] = dict(
        gamma=jax.random.uniform(ks[6], (c_out,), minval=0.5, maxval=1.5),
        beta=0.1 * jax.random.normal(ks[7], (c_out,)),
        mean=0.1 * jax.random.normal(ks[8], (c_out,)),
        var=jax.random.uniform(ks[9], (c_out,), minval=0.5, maxval=1.5))
    # ConvBlock 2: Conv2d(c_out, c_out, 3, padding=1) + BatchNorm2d(c_out)
    p["w2"] = 0.1 * jax.random.normal(ks[10], (c_out, c_out, 3, 3))  # OIHW
    p["b2"] = 0.05 * jax.random.normal(ks[11], (c_out,))
    p["bn2"] = dict(
        gamma=jax.random.uniform(ks[12], (c_out,), minval=0.5, maxval=1.5),
        beta=0.1 * jax.random.normal(ks[13], (c_out,)),
        mean=0.1 * jax.random.normal(ks[14], (c_out,)),
        var=jax.random.uniform(ks[15], (c_out,), minval=0.5, maxval=1.5))
    return jax.tree.map(lambda a: a.astype(jnp.float32), p)


# ----------------------------- reference (JAX) ------------------------------ #

def _ref_forward(x_nchw, params):
    x = jnp.transpose(x_nchw, (0, 2, 3, 1)).astype(jnp.float32)
    s0, b0 = fold_bn(**params["bn0"])
    x = x * s0 + b0

    def conv_bn_relu(x, w_oihw, bias, bn):
        w = jnp.transpose(w_oihw, (2, 3, 1, 0))  # HWIO
        y = jax.lax.conv_general_dilated(
            x, w, window_strides=(1, 1), padding="SAME",
            dimension_numbers=("NHWC", "HWIO", "NHWC"))
        s, b = fold_bn(**bn, conv_bias=bias)
        return jnp.maximum(y * s + b, 0.0)

    x = conv_bn_relu(x, params["w1"], params["b1"], params["bn1"])
    x = conv_bn_relu(x, params["w2"], params["b2"], params["bn2"])
    return jnp.transpose(x, (0, 3, 1, 2))


# --------------------------------- main ------------------------------------- #

if __name__ == "__main__":
    key = jax.random.PRNGKey(0)
    k_x, k_p = jax.random.split(key)

    N, C_IN, C_OUT, H, W = 2, 4, 8, 16, 16
    x = jax.random.normal(k_x, (N, C_IN, H, W), dtype=jnp.float32)  # NCHW input
    params = init_params(k_p, C_IN, C_OUT)

    out = input_conv_forward(x, params)
    out = jax.block_until_ready(out)

    ref = jax.block_until_ready(_ref_forward(x, params))
    assert out.shape == (N, C_OUT, H, W), out.shape
    # bf16 MXU operands (f32 accumulation / f32 reference) -> relaxed tolerance.
    assert jnp.allclose(out, ref, atol=5e-2, rtol=5e-2), \
        float(jnp.max(jnp.abs(out - ref)))

    print("KERNEL_OK")
</pallas_src>

<mosaic_0001>
module attributes {stable_mosaic.version = 11 : i64} {
  func.func @fused_input_conv_kernel(%arg0: i32, %arg1: memref<1x16x64xf32, #tpu.memory_space<vmem>>, %arg2: memref<6x128xf32, #tpu.memory_space<vmem>>, %arg3: memref<3x64x128xbf16, #tpu.memory_space<vmem>>, %arg4: memref<3x128x128xbf16, #tpu.memory_space<vmem>>, %arg5: memref<1x16x128xf32, #tpu.memory_space<vmem>>, %arg6: memref<18x64xf32, #tpu.memory_space<vmem>>, %arg7: memref<18x128xf32, #tpu.memory_space<vmem>>) attributes {dimension_semantics = [#tpu.dimension_semantics<parallel>], iteration_bounds = array<i64: 2>, scalar_prefetch = 0 : i64, scratch_operands = 2 : i64, tpu.core_type = #tpu.core_type<tc>, window_params = [{transform_indices = @transform_0, window_bounds = array<i64: 1, 16, 64>}, {pipeline_mode = #tpu.pipeline_mode<synchronous>, transform_indices = @transform_1, window_bounds = array<i64: 6, 128>}, {pipeline_mode = #tpu.pipeline_mode<synchronous>, transform_indices = @transform_2, window_bounds = array<i64: 3, 64, 128>}, {pipeline_mode = #tpu.pipeline_mode<synchronous>, transform_indices = @transform_3, window_bounds = array<i64: 3, 128, 128>}, {transform_indices = @transform_4, window_bounds = array<i64: 1, 16, 128>}]} {
    %cst = arith.constant 0.000000e+00 : f32
    %0 = vector.broadcast %cst : f32 to vector<1x64xf32>
    %c0 = arith.constant 0 : index
    %c0_0 = arith.constant 0 : index
    %1 = vector.load %arg6[%c0, %c0_0] : memref<18x64xf32, #tpu.memory_space<vmem>>, vector<1x64xf32>
    tpu.vector_store %arg6[%c0, %c0_0], %0 {strides = array<i32>} : memref<18x64xf32, #tpu.memory_space<vmem>>, vector<1x64xf32>,
    %cst_1 = arith.constant 0.000000e+00 : f32
    %2 = vector.broadcast %cst_1 : f32 to vector<1x64xf32>
    %c17 = arith.constant 17 : index
    %c0_2 = arith.constant 0 : index
    %3 = vector.load %arg6[%c17, %c0_2] : memref<18x64xf32, #tpu.memory_space<vmem>>, vector<1x64xf32>
    tpu.vector_store %arg6[%c17, %c0_2], %2 {strides = array<i32>} : memref<18x64xf32, #tpu.memory_space<vmem>>, vector<1x64xf32>,
    %cst_3 = arith.constant 0.000000e+00 : f32
    %4 = vector.broadcast %cst_3 : f32 to vector<1x128xf32>
    %c0_4 = arith.constant 0 : index
    %c0_5 = arith.constant 0 : index
    %5 = vector.load %arg7[%c0_4, %c0_5] : memref<18x128xf32, #tpu.memory_space<vmem>>, vector<1x128xf32>
    tpu.vector_store %arg7[%c0_4, %c0_5], %4 {strides = array<i32>} : memref<18x128xf32, #tpu.memory_space<vmem>>, vector<1x128xf32>,
    %cst_6 = arith.constant 0.000000e+00 : f32
    %6 = vector.broadcast %cst_6 : f32 to vector<1x128xf32>
    %c17_7 = arith.constant 17 : index
    %c0_8 = arith.constant 0 : index
    %7 = vector.load %arg7[%c17_7, %c0_8] : memref<18x128xf32, #tpu.memory_space<vmem>>, vector<1x128xf32>
    tpu.vector_store %arg7[%c17_7, %c0_8], %6 {strides = array<i32>} : memref<18x128xf32, #tpu.memory_space<vmem>>, vector<1x128xf32>,
    %c0_9 = arith.constant 0 : index
    %c0_10 = arith.constant 0 : index
    %8 = vector.load %arg2[%c0_9, %c0_10] : memref<6x128xf32, #tpu.memory_space<vmem>>, vector<1x64xf32>
    %c1 = arith.constant 1 : index
    %c0_11 = arith.constant 0 : index
    %9 = vector.load %arg2[%c1, %c0_11] : memref<6x128xf32, #tpu.memory_space<vmem>>, vector<1x64xf32>
    %c2 = arith.constant 2 : index
    %c0_12 = arith.constant 0 : index
    %10 = vector.load %arg2[%c2, %c0_12] : memref<6x128xf32, #tpu.memory_space<vmem>>, vector<1x128xf32>
    %c3 = arith.constant 3 : index
    %c0_13 = arith.constant 0 : index
    %11 = vector.load %arg2[%c3, %c0_13] : memref<6x128xf32, #tpu.memory_space<vmem>>, vector<1x128xf32>
    %c4 = arith.constant 4 : index
    %c0_14 = arith.constant 0 : index
    %12 = vector.load %arg2[%c4, %c0_14] : memref<6x128xf32, #tpu.memory_space<vmem>>, vector<1x128xf32>
    %c5 = arith.constant 5 : index
    %c0_15 = arith.constant 0 : index
    %13 = vector.load %arg2[%c5, %c0_15] : memref<6x128xf32, #tpu.memory_space<vmem>>, vector<1x128xf32>
    %c0_16 = arith.constant 0 : index
    %c0_17 = arith.constant 0 : index
    %c0_18 = arith.constant 0 : index
    %14 = vector.load %arg1[%c0_16, %c0_17, %c0_18] : memref<1x16x64xf32, #tpu.memory_space<vmem>>, vector<1x16x64xf32>
    %15 = vector.shape_cast %14 : vector<1x16x64xf32> to vector<16x64xf32>
    %16 = vector.broadcast %8 : vector<1x64xf32> to vector<16x64xf32>
    %17 = arith.mulf %15, %16 : vector<16x64xf32>
    %18 = vector.broadcast %9 : vector<1x64xf32> to vector<16x64xf32>
    %19 = arith.addf %17, %18 : vector<16x64xf32>
    %c1_19 = arith.constant 1 : index
    %c0_20 = arith.constant 0 : index
    %20 = vector.load %arg6[%c1_19, %c0_20] : memref<18x64xf32, #tpu.memory_space<vmem>>, vector<16x64xf32>
    tpu.vector_store %arg6[%c1_19, %c0_20], %19 {strides = array<i32>} : memref<18x64xf32, #tpu.memory_space<vmem>>, vector<16x64xf32>,
    %c0_21 = arith.constant 0 : index
    %c0_22 = arith.constant 0 : index
    %21 = vector.load %arg6[%c0_21, %c0_22] : memref<18x64xf32, #tpu.memory_space<vmem>>, vector<18x64xf32>
    %22 = arith.truncf %21 : vector<18x64xf32> to vector<18x64xbf16>
    %23 = vector.extract_strided_slice %22 {offsets = [0, 0], sizes = [16, 64], strides = [1, 1]} : vector<18x64xbf16> to vector<16x64xbf16>
    %c0_23 = arith.constant 0 : index
    %c0_24 = arith.constant 0 : index
    %c0_25 = arith.constant 0 : index
    %24 = vector.load %arg3[%c0_23, %c0_24, %c0_25] : memref<3x64x128xbf16, #tpu.memory_space<vmem>>, vector<1x64x128xbf16>
    %25 = vector.shape_cast %24 : vector<1x64x128xbf16> to vector<64x128xbf16>
    %cst_26 = arith.constant dense<0.000000e+00> : vector<16x128xf32>
    %26 = tpu.matmul %23, %25, %cst_26 {dimension_numbers = #tpu.dot_dimension_numbers<[1], [0], [0], [1], [0, 0, 1, 1], [], []>} : vector<16x64xbf16>, vector<64x128xbf16>, vector<16x128xf32> -> vector<16x128xf32>
    %27 = vector.extract_strided_slice %22 {offsets = [1, 0], sizes = [16, 64], strides = [1, 1]} : vector<18x64xbf16> to vector<16x64xbf16>
    %c1_27 = arith.constant 1 : index
    %c0_28 = arith.constant 0 : index
    %c0_29 = arith.constant 0 : index
    %28 = vector.load %arg3[%c1_27, %c0_28, %c0_29] : memref<3x64x128xbf16, #tpu.memory_space<vmem>>, vector<1x64x128xbf16>
    %29 = vector.shape_cast %28 : vector<1x64x128xbf16> to vector<64x128xbf16>
    %cst_30 = arith.constant dense<0.000000e+00> : vector<16x128xf32>
    %30 = tpu.matmul %27, %29, %cst_30 {dimension_numbers = #tpu.dot_dimension_numbers<[1], [0], [0], [1], [0, 0, 1, 1], [], []>} : vector<16x64xbf16>, vector<64x128xbf16>, vector<16x128xf32> -> vector<16x128xf32>
    %31 = arith.addf %26, %30 : vector<16x128xf32>
    %32 = vector.extract_strided_slice %22 {offsets = [2, 0], sizes = [16, 64], strides = [1, 1]} : vector<18x64xbf16> to vector<16x64xbf16>
    %c2_31 = arith.constant 2 : index
    %c0_32 = arith.constant 0 : index
    %c0_33 = arith.constant 0 : index
    %33 = vector.load %arg3[%c2_31, %c0_32, %c0_33] : memref<3x64x128xbf16, #tpu.memory_space<vmem>>, vector<1x64x128xbf16>
    %34 = vector.shape_cast %33 : vector<1x64x128xbf16> to vector<64x128xbf16>
    %cst_34 = arith.constant dense<0.000000e+00> : vector<16x128xf32>
    %35 = tpu.matmul %32, %34, %cst_34 {dimension_numbers = #tpu.dot_dimension_numbers<[1], [0], [0], [1], [0, 0, 1, 1], [], []>} : vector<16x64xbf16>, vector<64x128xbf16>, vector<16x128xf32> -> vector<16x128xf32>
    %36 = arith.addf %31, %35 : vector<16x128xf32>
    %37 = vector.broadcast %10 : vector<1x128xf32> to vector<16x128xf32>
    %38 = arith.mulf %36, %37 : vector<16x128xf32>
    %39 = vector.broadcast %11 : vector<1x128xf32> to vector<16x128xf32>
    %40 = arith.addf %38, %39 : vector<16x128xf32>
    %cst_35 = arith.constant 0.000000e+00 : f32
    %41 = vector.broadcast %cst_35 : f32 to vector<16x128xf32>
    %42 = arith.maximumf %40, %41 : vector<16x128xf32>
    %c1_36 = arith.constant 1 : index
    %c0_37 = arith.constant 0 : index
    %43 = vector.load %arg7[%c1_36, %c0_37] : memref<18x128xf32, #tpu.memory_space<vmem>>, vector<16x128xf32>
    tpu.vector_store %arg7[%c1_36, %c0_37], %42 {strides = array<i32>} : memref<18x128xf32, #tpu.memory_space<vmem>>, vector<16x128xf32>,
    %c0_38 = arith.constant 0 : index
    %c0_39 = arith.constant 0 : index
    %44 = vector.load %arg7[%c0_38, %c0_39] : memref<18x128xf32, #tpu.memory_space<vmem>>, vector<18x128xf32>
    %45 = arith.truncf %44 : vector<18x128xf32> to vector<18x128xbf16>
    %46 = vector.extract_strided_slice %45 {offsets = [0, 0], sizes = [16, 128], strides = [1, 1]} : vector<18x128xbf16> to vector<16x128xbf16>
    %c0_40 = arith.constant 0 : index
    %c0_41 = arith.constant 0 : index
    %c0_42 = arith.constant 0 : index
    %47 = vector.load %arg4[%c0_40, %c0_41, %c0_42] : memref<3x128x128xbf16, #tpu.memory_space<vmem>>, vector<1x128x128xbf16>
    %48 = vector.shape_cast %47 : vector<1x128x128xbf16> to vector<128x128xbf16>
    %cst_43 = arith.constant dense<0.000000e+00> : vector<16x128xf32>
    %49 = tpu.matmul %46, %48, %cst_43 {dimension_numbers = #tpu.dot_dimension_numbers<[1], [0], [0], [1], [0, 0, 1, 1], [], []>} : vector<16x128xbf16>, vector<128x128xbf16>, vector<16x128xf32> -> vector<16x128xf32>
    %50 = vector.extract_strided_slice %45 {offsets = [1, 0], sizes = [16, 128], strides = [1, 1]} : vector<18x128xbf16> to vector<16x128xbf16>
    %c1_44 = arith.constant 1 : index
    %c0_45 = arith.constant 0 : index
    %c0_46 = arith.constant 0 : index
    %51 = vector.load %arg4[%c1_44, %c0_45, %c0_46] : memref<3x128x128xbf16, #tpu.memory_space<vmem>>, vector<1x128x128xbf16>
    %52 = vector.shape_cast %51 : vector<1x128x128xbf16> to vector<128x128xbf16>
    %cst_47 = arith.constant dense<0.000000e+00> : vector<16x128xf32>
    %53 = tpu.matmul %50, %52, %cst_47 {dimension_numbers = #tpu.dot_dimension_numbers<[1], [0], [0], [1], [0, 0, 1, 1], [], []>} : vector<16x128xbf16>, vector<128x128xbf16>, vector<16x128xf32> -> vector<16x128xf32>
    %54 = arith.addf %49, %53 : vector<16x128xf32>
    %55 = vector.extract_strided_slice %45 {offsets = [2, 0], sizes = [16, 128], strides = [1, 1]} : vector<18x128xbf16> to vector<16x128xbf16>
    %c2_48 = arith.constant 2 : index
    %c0_49 = arith.constant 0 : index
    %c0_50 = arith.constant 0 : index
    %56 = vector.load %arg4[%c2_48, %c0_49, %c0_50] : memref<3x128x128xbf16, #tpu.memory_space<vmem>>, vector<1x128x128xbf16>
    %57 = vector.shape_cast %56 : vector<1x128x128xbf16> to vector<128x128xbf16>
    %cst_51 = arith.constant dense<0.000000e+00> : vector<16x128xf32>
    %58 = tpu.matmul %55, %57, %cst_51 {dimension_numbers = #tpu.dot_dimension_numbers<[1], [0], [0], [1], [0, 0, 1, 1], [], []>} : vector<16x128xbf16>, vector<128x128xbf16>, vector<16x128xf32> -> vector<16x128xf32>
    %59 = arith.addf %54, %58 : vector<16x128xf32>
    %60 = vector.broadcast %12 : vector<1x128xf32> to vector<16x128xf32>
    %61 = arith.mulf %59, %60 : vector<16x128xf32>
    %62 = vector.broadcast %13 : vector<1x128xf32> to vector<16x128xf32>
    %63 = arith.addf %61, %62 : vector<16x128xf32>
    %cst_52 = arith.constant 0.000000e+00 : f32
    %64 = vector.broadcast %cst_52 : f32 to vector<16x128xf32>
    %65 = arith.maximumf %63, %64 : vector<16x128xf32>
    %c0_53 = arith.constant 0 : index
    %c0_54 = arith.constant 0 : index
    %c0_55 = arith.constant 0 : index
    %66 = vector.load %arg5[%c0_53, %c0_54, %c0_55] : memref<1x16x128xf32, #tpu.memory_space<vmem>>, vector<1x16x128xf32>
    %67 = vector.shape_cast %66 : vector<1x16x128xf32> to vector<16x128xf32>
    %68 = vector.shape_cast %65 : vector<16x128xf32> to vector<1x16x128xf32>
    tpu.vector_store %arg5[%c0_53, %c0_54, %c0_55], %68 {strides = array<i32>} : memref<1x16x128xf32, #tpu.memory_space<vmem>>, vector<1x16x128xf32>,
    return
  }
  func.func @transform_0(%arg0: i32) -> (i32, i32, i32) {
    %c0_i32 = arith.constant 0 : i32
    %c0_i32_0 = arith.constant 0 : i32
    %c0_i32_1 = arith.constant 0 : i32
    return %arg0, %c0_i32, %c0_i32_0 : i32, i32, i32
  }
  func.func @transform_1(%arg0: i32) -> (i32, i32) {
    %c0_i32 = arith.constant 0 : i32
    %c0_i32_0 = arith.constant 0 : i32
    %c0_i32_1 = arith.constant 0 : i32
    return %c0_i32, %c0_i32_0 : i32, i32
  }
  func.func @transform_2(%arg0: i32) -> (i32, i32, i32) {
    %c0_i32 = arith.constant 0 : i32
    %c0_i32_0 = arith.constant 0 : i32
    %c0_i32_1 = arith.constant 0 : i32
    %c0_i32_2 = arith.constant 0 : i32
    return %c0_i32, %c0_i32_0, %c0_i32_1 : i32, i32, i32
  }
  func.func @transform_3(%arg0: i32) -> (i32, i32, i32) {
    %c0_i32 = arith.constant 0 : i32
    %c0_i32_0 = arith.constant 0 : i32
    %c0_i32_1 = arith.constant 0 : i32
    %c0_i32_2 = arith.constant 0 : i32
    return %c0_i32, %c0_i32_0, %c0_i32_1 : i32, i32, i32
  }
  func.func @transform_4(%arg0: i32) -> (i32, i32, i32) {
    %c0_i32 = arith.constant 0 : i32
    %c0_i32_0 = arith.constant 0 : i32
    %c0_i32_1 = arith.constant 0 : i32
    return %arg0, %c0_i32, %c0_i32_0 : i32, i32, i32
  }
}

</mosaic_0001>

<llo_original>
// kernel: tpu_custom_call.1
$region0: #{tpu_custom_call.1}
  #allocation0 [shape = 'u32[]', space=smem, size = 0x4, offset = 0x4, fixed_abs, tag = 'smem constant byte address 0x4 - core index']
  #allocation1 [shape = 'u32[144,128]{1,0:T(1,128)}', space=vmem, size = 0x12000, scoped, tag = 'internal scratch']
  #allocation2 [shape = 'f32[18,64]{1,0:T(8,128)}', space=vmem, size = 0x3000, scoped, tag = 'scratch operand']
  #allocation3 [shape = 'f32[18,128]{1,0:T(8,128)}', space=vmem, size = 0x3000, scoped, tag = 'scratch operand']
  %s0 = inlined_call_operand.hbm [shape: f32[2,16,64], index: 0, kind: input, shape index: {}]
  %s1 = inlined_call_operand.hbm [shape: f32[6,128], index: 1, kind: input, shape index: {}]
  %s2 = inlined_call_operand.hbm [shape: bf16[3,64,128], index: 2, kind: input, shape index: {}]
  %s3 = inlined_call_operand.hbm [shape: bf16[3,128,128], index: 3, kind: input, shape index: {}]
  %s4 = inlined_call_operand.hbm [shape: f32[2,16,128], index: 4, kind: output, shape index: {}]
  %s5 = sld [smem:[#allocation0]]
  $region65: #{tpu_custom_call.1} parent=0
    _
  %s7 = ssub.s32 1, %s5
  %s8 = scalar_select 0, %s7, %s5
  $region1: #{tpu_custom_call.1} parent=0
    #allocation4 [shape = 'u8[16384]{0}', space=vmem, size = 0x4000, scoped, tag = 'input window, operand 0']
    #allocation5 [shape = 's32[2]{0}', space=sflag, size = 0x8, scoped, tag = 'scoped memory for tpu_custom_call.1']
    #allocation6 [shape = 's32[2]{0}', space=sflag, size = 0x8, scoped, tag = 'scoped memory for tpu_custom_call.1']
    #allocation7 [shape = 'u8[4096]{0}', space=vmem, size = 0x1000, scoped, tag = 'input window, operand 1, single buffered']
    #allocation8 [shape = 's32[1]{0}', space=sflag, size = 0x4, scoped, tag = 'scoped memory for tpu_custom_call.1']
    #allocation9 [shape = 'u8[49152]{0}', space=vmem, size = 0xc000, scoped, tag = 'input window, operand 2, single buffered']
    #allocation10 [shape = 'u8[98304]{0}', space=vmem, size = 0x18000, scoped, tag = 'input window, operand 3, single buffered']
    #allocation11 [shape = 's32[1]{0}', space=sflag, size = 0x4, scoped, tag = 'scoped memory for tpu_custom_call.1']
    #allocation12 [shape = 'u8[16384]{0}', space=vmem, size = 0x4000, scoped, tag = 'output window, operand 0']
    %9 = vsyncpa [#allocation5], 0
    %s10 = scalar_lea.sflag [#allocation5], 1
    %11 = vsyncpa %s10, 0
    %12 = vsyncpa [#allocation8], 0
    %13 = vsyncpa [#allocation11], 0
    %14 = vsyncpa [#allocation6], 0
    %s15 = scalar_lea.sflag [#allocation6], 1
    %16 = vsyncpa %s15, 0
    loop: start=0, step=1, limit=4
    $region2: #{tpu_custom_call.1} parent=1 // loop_pre_header
      _
    $region3: #{tpu_custom_call.1} parent=1 // loop_header
      %s18 = sphi 0, %s22
      %p19 = scmp.ge.s32.totalorder %s18, 4
      %s28 = sphi 0, %s30
      %s31 = sphi 0, %s28
      %s32 = sphi 0, %s31
      %s48 = sphi 0, %s32
      %s52 = sphi 0, %s52
      %s54 = sphi 0, %s52
      %s55 = sphi 0, %s54
      %s69 = sphi 0, %s55
      %s73 = sphi 0, %s73
      %s75 = sphi 0, %s73
      %s76 = sphi 0, %s75
      %s90 = sphi 0, %s76
      %s94 = sphi 0, %s94
      %s96 = sphi 0, %s94
      %s97 = sphi 0, %s96
      %s111 = sphi 0, %s97
      %s117 = sphi 0, %s119
      %s120 = sphi 0, %s117
      %s121 = sphi 0, %s120
      %s137 = sphi 0, %s121
    $region4: #{tpu_custom_call.1} parent=1 // loop_header_branch
      %21 = sbr.rel (%p19) target = $region8
    $region5: #{tpu_custom_call.1} parent=1 // loop_body
      %s23 = ssub.s32 %s18, 1
      %s24 = ssub.s32 %s18, 2
      %s25 = sadd.s32 %s18, 1
      %s26 = ssub.s32 %s18, %s25
      %p27 = scmp.eq.s32.totalorder %s26, 0
      %s29 = sadd.s32 %s28, 1
      %s30 = scalar_select %p27, %s28, %s29
      %p33 = pneg %p27
      %p34 = scmp.eq.s32.totalorder %s18, 1
      %p35 = por %p33, %p34
      %p36 = scmp.ne.s32.totalorder %s28, %s31
      %p37 = scmp.eq.s32.totalorder %s18, 0
      %p38 = por %p36, %p37
      %p39 = scmp.ne.s32.totalorder %s28, %s31
      %p40 = scmp.eq.s32.totalorder %s23, 1
      %p41 = por %p39, %p40
      %p42 = scmp.ne.s32.totalorder %s31, %s32
      %p43 = scmp.eq.s32.totalorder %s23, 0
      %p44 = por %p42, %p43
      %p45 = scmp.ne.s32.totalorder %s31, %s32
      %p46 = scmp.eq.s32.totalorder %s24, 1
      %p47 = por %p45, %p46
      %p49 = scmp.ne.s32.totalorder %s32, %s48
      %p50 = scmp.eq.s32.totalorder %s24, 0
      %p51 = por %p49, %p50
      %s53 = sadd.s32 %s52, 1
      %p56 = scmp.eq.s32.totalorder %s18, 1
      %p57 = scmp.ne.s32.totalorder %s52, %s54
      %p58 = scmp.eq.s32.totalorder %s18, 0
      %p59 = por %p57, %p58
      %p60 = scmp.ne.s32.totalorder %s52, %s54
      %p61 = scmp.eq.s32.totalorder %s23, 1
      %p62 = por %p60, %p61
      %p63 = scmp.ne.s32.totalorder %s54, %s55
      %p64 = scmp.eq.s32.totalorder %s23, 0
      %p65 = por %p63, %p64
      %p66 = scmp.ne.s32.totalorder %s54, %s55
      %p67 = scmp.eq.s32.totalorder %s24, 1
      %p68 = por %p66, %p67
      %p70 = scmp.ne.s32.totalorder %s55, %s69
      %p71 = scmp.eq.s32.totalorder %s24, 0
      %p72 = por %p70, %p71
      %s74 = sadd.s32 %s73, 1
      %p77 = scmp.eq.s32.totalorder %s18, 1
      %p78 = scmp.ne.s32.totalorder %s73, %s75
      %p79 = scmp.eq.s32.totalorder %s18, 0
      %p80 = por %p78, %p79
      %p81 = scmp.ne.s32.totalorder %s73, %s75
      %p82 = scmp.eq.s32.totalorder %s23, 1
      %p83 = por %p81, %p82
      %p84 = scmp.ne.s32.totalorder %s75, %s76
      %p85 = scmp.eq.s32.totalorder %s23, 0
      %p86 = por %p84, %p85
      %p87 = scmp.ne.s32.totalorder %s75, %s76
      %p88 = scmp.eq.s32.totalorder %s24, 1
      %p89 = por %p87, %p88
      %p91 = scmp.ne.s32.totalorder %s76, %s90
      %p92 = scmp.eq.s32.totalorder %s24, 0
      %p93 = por %p91, %p92
      %s95 = sadd.s32 %s94, 1
      %p98 = scmp.eq.s32.totalorder %s18, 1
      %p99 = scmp.ne.s32.totalorder %s94, %s96
      %p100 = scmp.eq.s32.totalorder %s18, 0
      %p101 = por %p99, %p100
      %p102 = scmp.ne.s32.totalorder %s94, %s96
      %p103 = scmp.eq.s32.totalorder %s23, 1
      %p104 = por %p102, %p103
      %p105 = scmp.ne.s32.totalorder %s96, %s97
      %p106 = scmp.eq.s32.totalorder %s23, 0
      %p107 = por %p105, %p106
      %p108 = scmp.ne.s32.totalorder %s96, %s97
      %p109 = scmp.eq.s32.totalorder %s24, 1
      %p110 = por %p108, %p109
      %p112 = scmp.ne.s32.totalorder %s97, %s111
      %p113 = scmp.eq.s32.totalorder %s24, 0
      %p114 = por %p112, %p113
      %s115 = ssub.s32 %s18, %s25
      %p116 = scmp.eq.s32.totalorder %s115, 0
      %s118 = sadd.s32 %s117, 1
      %s119 = scalar_select %p116, %s117, %s118
      %p122 = pneg %p116
      %p123 = scmp.eq.s32.totalorder %s18, 1
      %p124 = por %p122, %p123
      %p125 = scmp.ne.s32.totalorder %s117, %s120
      %p126 = scmp.eq.s32.totalorder %s18, 0
      %p127 = por %p125, %p126
      %p128 = scmp.ne.s32.totalorder %s117, %s120
      %p129 = scmp.eq.s32.totalorder %s23, 1
      %p130 = por %p128, %p129
      %p131 = scmp.ne.s32.totalorder %s120, %s121
      %p132 = scmp.eq.s32.totalorder %s23, 0
      %p133 = por %p131, %p132
      %p134 = scmp.ne.s32.totalorder %s120, %s121
      %p135 = scmp.eq.s32.totalorder %s24, 1
      %p136 = por %p134, %p135
      %p138 = scmp.ne.s32.totalorder %s121, %s137
      %p139 = scmp.eq.s32.totalorder %s24, 0
      %p140 = por %p138, %p139
      %p141 = scmp.le.s32.totalorder 1, %s18
      %p142 = scmp.lt.s32.totalorder %s18, 3
      %p143 = pnand %p141, %p142
      %p144 = pneg %p143
      // Predicated region
      $region9: #{tpu_custom_call.1} parent=5 // pred_check
        _
      $region10: #{tpu_custom_call.1} parent=5 // pred_check_branch
        %146 = sbr.rel (%p143) target = $region12
      $region11: #{tpu_custom_call.1} parent=5 // pred_region
        %s147 = ssub.s32 %s18, 1
        // Predicated region
        $region13: #{tpu_custom_call.1} parent=11 // pred_check
          %p148 = pneg %p65
        $region14: #{tpu_custom_call.1} parent=11 // pred_check_branch
          %150 = sbr.rel (%p148) target = $region16
        $region15: #{tpu_custom_call.1} parent=11 // pred_region
          %s152 = ssub.s32 128, 128
          %153 = vsyncadd [#allocation8], %s152
          %s155 = sshll.u32 [#allocation7], 4
          %s156 = int_to_ptr.vmem [resolvable:$true] %s155
          %158 = dma.hbm_to_vmem [thread:$0]  %s1, 128, %s156, [#allocation8]
        $region16: #{tpu_custom_call.1} parent=11 // pred_fallthru
          _
        // Predicated region
        $region17: #{tpu_custom_call.1} parent=11 // pred_check
          %p159 = pneg %p86
        $region18: #{tpu_custom_call.1} parent=11 // pred_check_branch
          %161 = sbr.rel (%p159) target = $region20
        $region19: #{tpu_custom_call.1} parent=11 // pred_region
          %s163 = ssub.s32 1536, 1536
          %164 = vsyncadd [#allocation8], %s163
          %s165 = sshll.u32 [#allocation9], 4
          %s166 = int_to_ptr.vmem [resolvable:$true] %s165
          %171 = dma.hbm_to_vmem [thread:$0]  %s2, 1536, %s166, [#allocation8], 64, 64, 4
        $region20: #{tpu_custom_call.1} parent=11 // pred_fallthru
          _
        // Predicated region
        $region21: #{tpu_custom_call.1} parent=11 // pred_check
          %p172 = pneg %p107
        $region22: #{tpu_custom_call.1} parent=11 // pred_check_branch
          %174 = sbr.rel (%p172) target = $region24
        $region23: #{tpu_custom_call.1} parent=11 // pred_region
          %s176 = ssub.s32 3072, 3072
          %177 = vsyncadd [#allocation11], %s176
          %s178 = sshll.u32 [#allocation10], 4
          %s179 = int_to_ptr.vmem [resolvable:$true] %s178
          %184 = dma.hbm_to_vmem [thread:$0]  %s3, 3072, %s179, [#allocation11], 64, 64, 4
        $region24: #{tpu_custom_call.1} parent=11 // pred_fallthru
          _
      $region12: #{tpu_custom_call.1} parent=5 // pred_fallthru
        _
      %p185 = scmp.lt.s32.totalorder %s18, 2
      // Predicated region
      $region25: #{tpu_custom_call.1} parent=5 // pred_check
        %p186 = pneg %p185
      $region26: #{tpu_custom_call.1} parent=5 // pred_check_branch
        %188 = sbr.rel (%p186) target = $region28
      $region27: #{tpu_custom_call.1} parent=5 // pred_region
        // Predicated region
        $region29: #{tpu_custom_call.1} parent=27 // pred_check
          %p189 = pneg %p38
        $region30: #{tpu_custom_call.1} parent=27 // pred_check_branch
          %191 = sbr.rel (%p189) target = $region32
        $region31: #{tpu_custom_call.1} parent=27 // pred_region
          %s192 = sand.u32 %s28, 1
          %s193 = scalar_lea.sflag [#allocation5], %s192
          %s194 = sand.u32 %s28, 1
          %s195 = smul.addr %s194, 16
          %s196 = scalar_lea.vmem [#allocation4], %s195
          %s198 = ssub.s32 256, 256
          %199 = vsyncadd %s193, %s198
          %s200 = smul.addr %s18, 2
          %s201 = smul.addr %s200, 128
          %s202 = scalar_lea.hbm %s0, %s201
          %s203 = sshll.u32 %s196, 4
          %s204 = int_to_ptr.vmem [resolvable:$true] %s203
          %209 = dma.hbm_to_vmem [thread:$0]  %s202, 256, %s204, %s193, 128, 128, 8
        $region32: #{tpu_custom_call.1} parent=27 // pred_fallthru
          _
      $region28: #{tpu_custom_call.1} parent=5 // pred_fallthru
        _
      %p210 = scmp.le.s32.totalorder 1, %s18
      %p211 = scmp.lt.s32.totalorder %s18, 3
      %p212 = pnand %p210, %p211
      %p213 = pneg %p212
      // Predicated region
      $region33: #{tpu_custom_call.1} parent=5 // pred_check
        _
      $region34: #{tpu_custom_call.1} parent=5 // pred_check_branch
        %215 = sbr.rel (%p212) target = $region36
      $region35: #{tpu_custom_call.1} parent=5 // pred_region
        %s216 = ssub.s32 %s18, 1
        %s217 = sand.u32 %s31, 1
        %s218 = scalar_lea.sflag [#allocation5], %s217
        %s219 = sand.u32 %s31, 1
        %s220 = smul.addr %s219, 16
        %s221 = scalar_lea.vmem [#allocation4], %s220
        // Predicated region
        $region37: #{tpu_custom_call.1} parent=35 // pred_check
          %p222 = pneg %p44
        $region38: #{tpu_custom_call.1} parent=35 // pred_check_branch
          %224 = sbr.rel (%p222) target = $region40
        $region39: #{tpu_custom_call.1} parent=35 // pred_region
          %225 = dma.done %s218, 256
        $region40: #{tpu_custom_call.1} parent=35 // pred_fallthru
          _
        // Predicated region
        $region41: #{tpu_custom_call.1} parent=35 // pred_check
          %p226 = pneg %p65
        $region42: #{tpu_custom_call.1} parent=35 // pred_check_branch
          %228 = sbr.rel (%p226) target = $region44
        $region43: #{tpu_custom_call.1} parent=35 // pred_region
          %229 = dma.done [#allocation8], 128
        $region44: #{tpu_custom_call.1} parent=35 // pred_fallthru
          _
        // Predicated region
        $region45: #{tpu_custom_call.1} parent=35 // pred_check
          %p230 = pneg %p86
        $region46: #{tpu_custom_call.1} parent=35 // pred_check_branch
          %232 = sbr.rel (%p230) target = $region48
        $region47: #{tpu_custom_call.1} parent=35 // pred_region
          %233 = dma.done [#allocation8], 1536
        $region48: #{tpu_custom_call.1} parent=35 // pred_fallthru
          _
        // Predicated region
        $region49: #{tpu_custom_call.1} parent=35 // pred_check
          %p234 = pneg %p107
        $region50: #{tpu_custom_call.1} parent=35 // pred_check_branch
          %236 = sbr.rel (%p234) target = $region52
        $region51: #{tpu_custom_call.1} parent=35 // pred_region
          %237 = dma.done [#allocation11], 3072
        $region52: #{tpu_custom_call.1} parent=35 // pred_fallthru
          _
        %s238 = sand.u32 %s31, 1
        %s239 = scalar_lea.sflag [#allocation5], %s238
        %s240 = sand.u32 %s31, 1
        %s241 = smul.addr %s240, 16
        %s242 = scalar_lea.vmem [#allocation4], %s241
        %p243 = pneg %p44
        %p244 = pneg %p41
        %p245 = pneg %p65
        %p246 = pneg %p62
        %p247 = pneg %p86
        %p248 = pneg %p83
        %p249 = pneg %p107
        %p250 = pneg %p104
        %p251 = pneg %p133
        %p252 = pneg %p130
        %s253 = sand.u32 %s120, 1
        %s254 = scalar_lea.sflag [#allocation6], %s253
        %s255 = sand.u32 %s120, 1
        %s256 = smul.addr %s255, 16
        %s257 = scalar_lea.vmem [#allocation12], %s256
        %vm259 = vcmask 516096
        %260 = vst.msk [vmem:[#allocation2] sm:$0x1] %vm259, 0.0
        %261 = vst.msk [vmem:[#allocation2 + $0x11] sm:$0x1] %vm259, 0.0
        %262 = vst [vmem:[#allocation3] sm:$0x1] 0.0
        %263 = vst [vmem:[#allocation3 + $0x11] sm:$0x1] 0.0
        %v264 = vld [vmem:[#allocation7] sm:$0x1]
        %v265 = vld [vmem:[#allocation7 + $0x1] sm:$0x1]
        %v266 = vld [vmem:[#allocation7 + $0x2] sm:$0x1]
        %v267 = vld [vmem:[#allocation7 + $0x3] sm:$0x1]
        %v268 = vld [vmem:[#allocation7 + $0x4] sm:$0x1]
        %v269 = vld [vmem:[#allocation7 + $0x5] sm:$0x1]
        %v270 = vld [vmem:[%s221] sm:$0xff]
        %v271 = vld [vmem:[%s221 + $0x8] sm:$0xff]
        %v272 = vlaneseq
        %v273 = vshrl.u32 %v272, 7
        %v274 = vsub.s32 0, %v273
        %v275 = vrot.slane %v264, %v274
        %v276 = vmul.f32 %v270, %v275
        %v277 = vmul.f32 %v271, %v275
        %v278 = vlaneseq
        %v279 = vshrl.u32 %v278, 7
        %v280 = vsub.s32 0, %v279
        %v281 = vrot.slane %v265, %v280
        %v282 = vadd.f32 %v276, %v281
        %v283 = vadd.f32 %v277, %v281
        %vm284 = vcmask 523264
        %285 = vst.msk [vmem:[#allocation2 + $0x1] sm:$0xff] %vm284, %v282
        %286 = vst.msk [vmem:[#allocation2 + $0x9] sm:$0xff] %vm284, %v283
        %v287 = vld [vmem:[#allocation2] sm:$0xff]
        %v288 = vld [vmem:[#allocation2 + $0x8] sm:$0xff]
        %v289 = vld [vmem:[#allocation2 + $0x10] sm:$0x3]
        %v290 = vpack.c.bf16 %v288, %v287
        %v291 = vpack.c.bf16 %v289, %v289
        %v292 = vld [vmem:[#allocation9] sm:$0xf]
        %v293 = vld [vmem:[#allocation9 + $0x4] sm:$0xf]
        %v294 = vld [vmem:[#allocation9 + $0x8] sm:$0xf]
        %v295 = vld [vmem:[#allocation9 + $0xc] sm:$0xf]
        %v296 = vld [vmem:[#allocation9 + $0x10] sm:$0xf]
        %v297 = vld [vmem:[#allocation9 + $0x14] sm:$0xf]
        %v298 = vld [vmem:[#allocation9 + $0x18] sm:$0xf]
        %v299 = vld [vmem:[#allocation9 + $0x1c] sm:$0xf]
        %s300 = scalar_lea.vmem [#allocation9], 32
        %v301 = vld [vmem:[%s300] sm:$0xf]
        %v302 = vld [vmem:[%s300 + $0x4] sm:$0xf]
        %v303 = vld [vmem:[%s300 + $0x8] sm:$0xf]
        %v304 = vld [vmem:[%s300 + $0xc] sm:$0xf]
        %v305 = vld [vmem:[%s300 + $0x10] sm:$0xf]
        %v306 = vld [vmem:[%s300 + $0x14] sm:$0xf]
        %v307 = vld [vmem:[%s300 + $0x18] sm:$0xf]
        %v308 = vld [vmem:[%s300 + $0x1c] sm:$0xf]
        %vm309 = vsmask.f32 7424
        %v311 = vshrl.u32 %v290, 16
        %v313 = vshll.u32 %v290, 16
        %v315 = vrot.slane %v313, 1
        %v316 = vor.u32 %v311, %v315
        %v318 = vshll.u32 %v291, 16
        %v320 = vrot.slane %v318, 1
        %v321 = vsel %vm309, %v316, %v320
        %v330 = vunpack.c.l.b16 %v301
        %v331 = vunpack.c.l.b16 %v302
        %v332 = vunpack.c.l.b16 %v303
        %v333 = vunpack.c.l.b16 %v304
        %v334 = vunpack.c.l.b16 %v305
        %v335 = vunpack.c.l.b16 %v306
        %v336 = vunpack.c.l.b16 %v307
        %v337 = vunpack.c.l.b16 %v308
        %v338 = vpack.c.b16 %v331, %v330
        %v339 = vpack.c.b16 %v333, %v332
        %v340 = vpack.c.b16 %v335, %v334
        %v341 = vpack.c.b16 %v337, %v336
        %v347 = vsel %vm284, %v321, 0
        %349 = vmatprep.subr.bf16.mxu0 0
        %350 = vmatpush1.bf16.msra.mxu0 %v338
        %351 = vmatprep.subr.bf16.mxu0 0
        %352 = vmatpush1.bf16.msra.mxu0 %v339
        %353 = vmatprep.subr.bf16.mxu0 0
        %354 = vmatpush1.bf16.msra.mxu0 %v340
        %355 = vmatprep.subr.bf16.mxu0 0
        %356 = vmatpush1.bf16.msra.mxu0 %v341
        %357 = vmatprep.subr.bf16.mxu0 0
        %358 = vmatpush1.bf16.msra.mxu0 0
        %359 = vmatprep.subr.bf16.mxu0 0
        %360 = vmatpush1.bf16.msra.mxu0 0
        %361 = vmatprep.subr.bf16.mxu0 0
        %362 = vmatpush1.bf16.msra.mxu0 0
        %363 = vmatprep.subr.bf16.mxu0 0
        %364 = vmatpush1.bf16.msra.mxu0 0
        %365 = vmatprep.subr.bf16.mxu0 0
        %366 = vmatpush1.bf16.msra.mxu0 0
        %367 = vmatprep.subr.bf16.mxu0 0
        %368 = vmatpush1.bf16.msra.mxu0 0
        %369 = vmatprep.subr.bf16.mxu0 0
        %370 = vmatpush1.bf16.msra.mxu0 0
        %371 = vmatprep.subr.bf16.mxu0 0
        %372 = vmatpush1.bf16.msra.mxu0 0
        %373 = vmatprep.subr.bf16.mxu0 0
        %374 = vmatpush1.bf16.msra.mxu0 0
        %375 = vmatprep.subr.bf16.mxu0 0
        %376 = vmatpush1.bf16.msra.mxu0 0
        %377 = vmatprep.subr.bf16.mxu0 0
        %378 = vmatpush1.bf16.msra.mxu0 0
        %379 = vmatprep.subr.bf16.mxu0 0
        %380 = vmatpush1.bf16.msra.mxu0 0
        %381 = vmatprep.mubr.bf16.mxu0 0
        %382 = vmatmul.mubr.bf16.gmra.mrb[0].mxu0 %v347
        %v383 = vpop.f32.mrb[0].mxu0
        %v384 = vadd.f32 0.0, %v383
        %v385 = vpop.f32.mrb[0].mxu0
        %v386 = vpop.f32.mrb[0].mxu0
        %v387 = vadd.f32 0.0, %v386
        %v388 = vpop.f32.mrb[0].mxu0
        %389 = vdwg.mxu0
        %v398 = vunpack.c.l.b16 %v292
        %v399 = vunpack.c.l.b16 %v293
        %v400 = vunpack.c.l.b16 %v294
        %v401 = vunpack.c.l.b16 %v295
        %v402 = vunpack.c.l.b16 %v296
        %v403 = vunpack.c.l.b16 %v297
        %v404 = vunpack.c.l.b16 %v298
        %v405 = vunpack.c.l.b16 %v299
        %v406 = vpack.c.b16 %v399, %v398
        %v407 = vpack.c.b16 %v401, %v400
        %v408 = vpack.c.b16 %v403, %v402
        %v409 = vpack.c.b16 %v405, %v404
        %v414 = vsel %vm284, %v290, 0
        %416 = vmatprep.subr.bf16.mxu0 0
        %417 = vmatpush1.bf16.msra.mxu0 %v406
        %418 = vmatprep.subr.bf16.mxu0 0
        %419 = vmatpush1.bf16.msra.mxu0 %v407
        %420 = vmatprep.subr.bf16.mxu0 0
        %421 = vmatpush1.bf16.msra.mxu0 %v408
        %422 = vmatprep.subr.bf16.mxu0 0
        %423 = vmatpush1.bf16.msra.mxu0 %v409
        %424 = vmatprep.subr.bf16.mxu0 0
        %425 = vmatpush1.bf16.msra.mxu0 0
        %426 = vmatprep.subr.bf16.mxu0 0
        %427 = vmatpush1.bf16.msra.mxu0 0
        %428 = vmatprep.subr.bf16.mxu0 0
        %429 = vmatpush1.bf16.msra.mxu0 0
        %430 = vmatprep.subr.bf16.mxu0 0
        %431 = vmatpush1.bf16.msra.mxu0 0
        %432 = vmatprep.subr.bf16.mxu0 0
        %433 = vmatpush1.bf16.msra.mxu0 0
        %434 = vmatprep.subr.bf16.mxu0 0
        %435 = vmatpush1.bf16.msra.mxu0 0
        %436 = vmatprep.subr.bf16.mxu0 0
        %437 = vmatpush1.bf16.msra.mxu0 0
        %438 = vmatprep.subr.bf16.mxu0 0
        %439 = vmatpush1.bf16.msra.mxu0 0
        %440 = vmatprep.subr.bf16.mxu0 0
        %441 = vmatpush1.bf16.msra.mxu0 0
        %442 = vmatprep.subr.bf16.mxu0 0
        %443 = vmatpush1.bf16.msra.mxu0 0
        %444 = vmatprep.subr.bf16.mxu0 0
        %445 = vmatpush1.bf16.msra.mxu0 0
        %446 = vmatprep.subr.bf16.mxu0 0
        %447 = vmatpush1.bf16.msra.mxu0 0
        %448 = vmatprep.mubr.bf16.mxu0 0
        %449 = vmatmul.mubr.bf16.gmra.mrb[0].mxu0 %v414
        %v450 = vpop.f32.mrb[0].mxu0
        %v451 = vadd.f32 %v384, %v450
        %v452 = vpop.f32.mrb[0].mxu0
        %v453 = vpop.f32.mrb[0].mxu0
        %v454 = vadd.f32 %v387, %v453
        %v455 = vpop.f32.mrb[0].mxu0
        %456 = vdwg.mxu0
        %s457 = scalar_lea.vmem [#allocation9], 64
        %v458 = vld [vmem:[%s457] sm:$0xf]
        %v459 = vld [vmem:[%s457 + $0x4] sm:$0xf]
        %v460 = vld [vmem:[%s457 + $0x8] sm:$0xf]
        %v461 = vld [vmem:[%s457 + $0xc] sm:$0xf]
        %v462 = vld [vmem:[%s457 + $0x10] sm:$0xf]
        %v463 = vld [vmem:[%s457 + $0x14] sm:$0xf]
        %v464 = vld [vmem:[%s457 + $0x18] sm:$0xf]
        %v465 = vld [vmem:[%s457 + $0x1c] sm:$0xf]
        %vm468 = vcmask 1046528
        %v469 = vrot.slane %v290, 1
        %v470 = vrot.slane %v291, 1
        %v471 = vsel %vm468, %v469, %v470
        %v480 = vunpack.c.l.b16 %v458
        %v481 = vunpack.c.l.b16 %v459
        %v482 = vunpack.c.l.b16 %v460
        %v483 = vunpack.c.l.b16 %v461
        %v484 = vunpack.c.l.b16 %v462
        %v485 = vunpack.c.l.b16 %v463
        %v486 = vunpack.c.l.b16 %v464
        %v487 = vunpack.c.l.b16 %v465
        %v488 = vpack.c.b16 %v481, %v480
        %v489 = vpack.c.b16 %v483, %v482
        %v490 = vpack.c.b16 %v485, %v484
        %v491 = vpack.c.b16 %v487, %v486
        %v497 = vsel %vm284, %v471, 0
        %499 = vmatprep.subr.bf16.mxu0 0
        %500 = vmatpush1.bf16.msra.mxu0 %v488
        %501 = vmatprep.subr.bf16.mxu0 0
        %502 = vmatpush1.bf16.msra.mxu0 %v489
        %503 = vmatprep.subr.bf16.mxu0 0
        %504 = vmatpush1.bf16.msra.mxu0 %v490
        %505 = vmatprep.subr.bf16.mxu0 0
        %506 = vmatpush1.bf16.msra.mxu0 %v491
        %507 = vmatprep.subr.bf16.mxu0 0
        %508 = vmatpush1.bf16.msra.mxu0 0
        %509 = vmatprep.subr.bf16.mxu0 0
        %510 = vmatpush1.bf16.msra.mxu0 0
        %511 = vmatprep.subr.bf16.mxu0 0
        %512 = vmatpush1.bf16.msra.mxu0 0
        %513 = vmatprep.subr.bf16.mxu0 0
        %514 = vmatpush1.bf16.msra.mxu0 0
        %515 = vmatprep.subr.bf16.mxu0 0
        %516 = vmatpush1.bf16.msra.mxu0 0
        %517 = vmatprep.subr.bf16.mxu0 0
        %518 = vmatpush1.bf16.msra.mxu0 0
        %519 = vmatprep.subr.bf16.mxu0 0
        %520 = vmatpush1.bf16.msra.mxu0 0
        %521 = vmatprep.subr.bf16.mxu0 0
        %522 = vmatpush1.bf16.msra.mxu0 0
        %523 = vmatprep.subr.bf16.mxu0 0
        %524 = vmatpush1.bf16.msra.mxu0 0
        %525 = vmatprep.subr.bf16.mxu0 0
        %526 = vmatpush1.bf16.msra.mxu0 0
        %527 = vmatprep.subr.bf16.mxu0 0
        %528 = vmatpush1.bf16.msra.mxu0 0
        %529 = vmatprep.subr.bf16.mxu0 0
        %530 = vmatpush1.bf16.msra.mxu0 0
        %531 = vmatprep.mubr.bf16.mxu0 0
        %532 = vmatmul.mubr.bf16.gmra.mrb[0].mxu0 %v497
        %v533 = vpop.f32.mrb[0].mxu0
        %v534 = vadd.f32 0.0, %v533
        %v535 = vpop.f32.mrb[0].mxu0
        %v536 = vpop.f32.mrb[0].mxu0
        %v537 = vadd.f32 0.0, %v536
        %v538 = vpop.f32.mrb[0].mxu0
        %539 = vdwg.mxu0
        %v540 = vadd.f32 %v451, %v534
        %v541 = vadd.f32 %v454, %v537
        %v542 = vlaneseq
        %v543 = vshrl.u32 %v542, 7
        %v544 = vsub.s32 0, %v543
        %v545 = vrot.slane %v266, %v544
        %v546 = vmul.f32 %v540, %v545
        %v547 = vmul.f32 %v541, %v545
        %v548 = vlaneseq
        %v549 = vshrl.u32 %v548, 7
        %v550 = vsub.s32 0, %v549
        %v551 = vrot.slane %v267, %v550
        %v552 = vadd.f32 %v546, %v551
        %v553 = vadd.f32 %v547, %v551
        %v554 = vmax.f32 %v552, 0.0
        %v555 = vmax.f32 %v553, 0.0
        %556 = vst [vmem:[#allocation3 + $0x1] sm:$0xff] %v554
        %557 = vst [vmem:[#allocation3 + $0x9] sm:$0xff] %v555
        %v558 = vld [vmem:[#allocation3] sm:$0xff]
        %v559 = vld [vmem:[#allocation3 + $0x8] sm:$0xff]
        %v560 = vld [vmem:[#allocation3 + $0x10] sm:$0x3]
        %v561 = vpack.c.bf16 %v559, %v558
        %v562 = vpack.c.bf16 %v560, %v560
        %v563 = vld [vmem:[#allocation10] sm:$0xf]
        %v564 = vld [vmem:[#allocation10 + $0x4] sm:$0xf]
        %v565 = vld [vmem:[#allocation10 + $0x8] sm:$0xf]
        %v566 = vld [vmem:[#allocation10 + $0xc] sm:$0xf]
        %v567 = vld [vmem:[#allocation10 + $0x10] sm:$0xf]
        %v568 = vld [vmem:[#allocation10 + $0x14] sm:$0xf]
        %v569 = vld [vmem:[#allocation10 + $0x18] sm:$0xf]
        %v570 = vld [vmem:[#allocation10 + $0x1c] sm:$0xf]
        %v571 = vld [vmem:[#allocation10 + $0x20] sm:$0xf]
        %v572 = vld [vmem:[#allocation10 + $0x24] sm:$0xf]
        %v573 = vld [vmem:[#allocation10 + $0x28] sm:$0xf]
        %v574 = vld [vmem:[#allocation10 + $0x2c] sm:$0xf]
        %v575 = vld [vmem:[#allocation10 + $0x30] sm:$0xf]
        %v576 = vld [vmem:[#allocation10 + $0x34] sm:$0xf]
        %v577 = vld [vmem:[#allocation10 + $0x38] sm:$0xf]
        %v578 = vld [vmem:[#allocation10 + $0x3c] sm:$0xf]
        %s579 = scalar_lea.vmem [#allocation10], 64
        %v580 = vld [vmem:[%s579] sm:$0xf]
        %v581 = vld [vmem:[%s579 + $0x4] sm:$0xf]
        %v582 = vld [vmem:[%s579 + $0x8] sm:$0xf]
        %v583 = vld [vmem:[%s579 + $0xc] sm:$0xf]
        %v584 = vld [vmem:[%s579 + $0x10] sm:$0xf]
        %v585 = vld [vmem:[%s579 + $0x14] sm:$0xf]
        %v586 = vld [vmem:[%s579 + $0x18] sm:$0xf]
        %v587 = vld [vmem:[%s579 + $0x1c] sm:$0xf]
        %v588 = vld [vmem:[%s579 + $0x20] sm:$0xf]
        %v589 = vld [vmem:[%s579 + $0x24] sm:$0xf]
        %v590 = vld [vmem:[%s579 + $0x28] sm:$0xf]
        %v591 = vld [vmem:[%s579 + $0x2c] sm:$0xf]
        %v592 = vld [vmem:[%s579 + $0x30] sm:$0xf]
        %v593 = vld [vmem:[%s579 + $0x34] sm:$0xf]
        %v594 = vld [vmem:[%s579 + $0x38] sm:$0xf]
        %v595 = vld [vmem:[%s579 + $0x3c] sm:$0xf]
        %v597 = vshrl.u32 %v561, 16
        %v599 = vshll.u32 %v561, 16
        %v601 = vrot.slane %v599, 1
        %v602 = vor.u32 %v597, %v601
        %v604 = vshll.u32 %v562, 16
        %v606 = vrot.slane %v604, 1
        %v607 = vsel %vm309, %v602, %v606
        %v625 = vunpack.c.l.b16 %v580
        %v626 = vunpack.c.l.b16 %v581
        %v627 = vunpack.c.l.b16 %v582
        %v628 = vunpack.c.l.b16 %v583
        %v629 = vunpack.c.l.b16 %v584
        %v630 = vunpack.c.l.b16 %v585
        %v631 = vunpack.c.l.b16 %v586
        %v632 = vunpack.c.l.b16 %v587
        %v633 = vunpack.c.l.b16 %v588
        %v634 = vunpack.c.l.b16 %v589
        %v635 = vunpack.c.l.b16 %v590
        %v636 = vunpack.c.l.b16 %v591
        %v637 = vunpack.c.l.b16 %v592
        %v638 = vunpack.c.l.b16 %v593
        %v639 = vunpack.c.l.b16 %v594
        %v640 = vunpack.c.l.b16 %v595
        %v641 = vpack.c.b16 %v626, %v625
        %v642 = vpack.c.b16 %v628, %v627
        %v643 = vpack.c.b16 %v630, %v629
        %v644 = vpack.c.b16 %v632, %v631
        %v645 = vpack.c.b16 %v634, %v633
        %v646 = vpack.c.b16 %v636, %v635
        %v647 = vpack.c.b16 %v638, %v637
        %v648 = vpack.c.b16 %v640, %v639
        %657 = vmatprep.subr.bf16.mxu0 0
        %658 = vmatpush1.bf16.msra.mxu0 %v641
        %659 = vmatprep.subr.bf16.mxu0 0
        %660 = vmatpush1.bf16.msra.mxu0 %v642
        %661 = vmatprep.subr.bf16.mxu0 0
        %662 = vmatpush1.bf16.msra.mxu0 %v643
        %663 = vmatprep.subr.bf16.mxu0 0
        %664 = vmatpush1.bf16.msra.mxu0 %v644
        %665 = vmatprep.subr.bf16.mxu0 0
        %666 = vmatpush1.bf16.msra.mxu0 %v645
        %667 = vmatprep.subr.bf16.mxu0 0
        %668 = vmatpush1.bf16.msra.mxu0 %v646
        %669 = vmatprep.subr.bf16.mxu0 0
        %670 = vmatpush1.bf16.msra.mxu0 %v647
        %671 = vmatprep.subr.bf16.mxu0 0
        %672 = vmatpush1.bf16.msra.mxu0 %v648
        %673 = vmatprep.subr.bf16.mxu0 0
        %674 = vmatpush1.bf16.msra.mxu0 0
        %675 = vmatprep.subr.bf16.mxu0 0
        %676 = vmatpush1.bf16.msra.mxu0 0
        %677 = vmatprep.subr.bf16.mxu0 0
        %678 = vmatpush1.bf16.msra.mxu0 0
        %679 = vmatprep.subr.bf16.mxu0 0
        %680 = vmatpush1.bf16.msra.mxu0 0
        %681 = vmatprep.subr.bf16.mxu0 0
        %682 = vmatpush1.bf16.msra.mxu0 0
        %683 = vmatprep.subr.bf16.mxu0 0
        %684 = vmatpush1.bf16.msra.mxu0 0
        %685 = vmatprep.subr.bf16.mxu0 0
        %686 = vmatpush1.bf16.msra.mxu0 0
        %687 = vmatprep.subr.bf16.mxu0 0
        %688 = vmatpush1.bf16.msra.mxu0 0
        %689 = vmatprep.mubr.bf16.mxu0 0
        %690 = vmatmul.mubr.bf16.gmra.mrb[0].mxu0 %v607
        %v691 = vpop.f32.mrb[0].mxu0
        %v692 = vadd.f32 0.0, %v691
        %v693 = vpop.f32.mrb[0].mxu0
        %v694 = vpop.f32.mrb[0].mxu0
        %v695 = vadd.f32 0.0, %v694
        %v696 = vpop.f32.mrb[0].mxu0
        %697 = vdwg.mxu0
        %v714 = vunpack.c.l.b16 %v563
        %v715 = vunpack.c.l.b16 %v564
        %v716 = vunpack.c.l.b16 %v565
        %v717 = vunpack.c.l.b16 %v566
        %v718 = vunpack.c.l.b16 %v567
        %v719 = vunpack.c.l.b16 %v568
        %v720 = vunpack.c.l.b16 %v569
        %v721 = vunpack.c.l.b16 %v570
        %v722 = vunpack.c.l.b16 %v571
        %v723 = vunpack.c.l.b16 %v572
        %v724 = vunpack.c.l.b16 %v573
        %v725 = vunpack.c.l.b16 %v574
        %v726 = vunpack.c.l.b16 %v575
        %v727 = vunpack.c.l.b16 %v576
        %v728 = vunpack.c.l.b16 %v577
        %v729 = vunpack.c.l.b16 %v578
        %v730 = vpack.c.b16 %v715, %v714
        %v731 = vpack.c.b16 %v717, %v716
        %v732 = vpack.c.b16 %v719, %v718
        %v733 = vpack.c.b16 %v721, %v720
        %v734 = vpack.c.b16 %v723, %v722
        %v735 = vpack.c.b16 %v725, %v724
        %v736 = vpack.c.b16 %v727, %v726
        %v737 = vpack.c.b16 %v729, %v728
        %746 = vmatprep.subr.bf16.mxu0 0
        %747 = vmatpush1.bf16.msra.mxu0 %v730
        %748 = vmatprep.subr.bf16.mxu0 0
        %749 = vmatpush1.bf16.msra.mxu0 %v731
        %750 = vmatprep.subr.bf16.mxu0 0
        %751 = vmatpush1.bf16.msra.mxu0 %v732
        %752 = vmatprep.subr.bf16.mxu0 0
        %753 = vmatpush1.bf16.msra.mxu0 %v733
        %754 = vmatprep.subr.bf16.mxu0 0
        %755 = vmatpush1.bf16.msra.mxu0 %v734
        %756 = vmatprep.subr.bf16.mxu0 0
        %757 = vmatpush1.bf16.msra.mxu0 %v735
        %758 = vmatprep.subr.bf16.mxu0 0
        %759 = vmatpush1.bf16.msra.mxu0 %v736
        %760 = vmatprep.subr.bf16.mxu0 0
        %761 = vmatpush1.bf16.msra.mxu0 %v737
        %762 = vmatprep.subr.bf16.mxu0 0
        %763 = vmatpush1.bf16.msra.mxu0 0
        %764 = vmatprep.subr.bf16.mxu0 0
        %765 = vmatpush1.bf16.msra.mxu0 0
        %766 = vmatprep.subr.bf16.mxu0 0
        %767 = vmatpush1.bf16.msra.mxu0 0
        %768 = vmatprep.subr.bf16.mxu0 0
        %769 = vmatpush1.bf16.msra.mxu0 0
        %770 = vmatprep.subr.bf16.mxu0 0
        %771 = vmatpush1.bf16.msra.mxu0 0
        %772 = vmatprep.subr.bf16.mxu0 0
        %773 = vmatpush1.bf16.msra.mxu0 0
        %774 = vmatprep.subr.bf16.mxu0 0
        %775 = vmatpush1.bf16.msra.mxu0 0
        %776 = vmatprep.subr.bf16.mxu0 0
        %777 = vmatpush1.bf16.msra.mxu0 0
        %778 = vmatprep.mubr.bf16.mxu0 0
        %779 = vmatmul.mubr.bf16.gmra.mrb[0].mxu0 %v561
        %v780 = vpop.f32.mrb[0].mxu0
        %v781 = vadd.f32 %v692, %v780
        %v782 = vpop.f32.mrb[0].mxu0
        %v783 = vpop.f32.mrb[0].mxu0
        %v784 = vadd.f32 %v695, %v783
        %v785 = vpop.f32.mrb[0].mxu0
        %786 = vdwg.mxu0
        %s787 = scalar_lea.vmem [#allocation10], 128
        %v788 = vld [vmem:[%s787] sm:$0xf]
        %v789 = vld [vmem:[%s787 + $0x4] sm:$0xf]
        %v790 = vld [vmem:[%s787 + $0x8] sm:$0xf]
        %v791 = vld [vmem:[%s787 + $0xc] sm:$0xf]
        %v792 = vld [vmem:[%s787 + $0x10] sm:$0xf]
        %v793 = vld [vmem:[%s787 + $0x14] sm:$0xf]
        %v794 = vld [vmem:[%s787 + $0x18] sm:$0xf]
        %v795 = vld [vmem:[%s787 + $0x1c] sm:$0xf]
        %v796 = vld [vmem:[%s787 + $0x20] sm:$0xf]
        %v797 = vld [vmem:[%s787 + $0x24] sm:$0xf]
        %v798 = vld [vmem:[%s787 + $0x28] sm:$0xf]
        %v799 = vld [vmem:[%s787 + $0x2c] sm:$0xf]
        %v800 = vld [vmem:[%s787 + $0x30] sm:$0xf]
        %v801 = vld [vmem:[%s787 + $0x34] sm:$0xf]
        %v802 = vld [vmem:[%s787 + $0x38] sm:$0xf]
        %v803 = vld [vmem:[%s787 + $0x3c] sm:$0xf]
        %v806 = vrot.slane %v561, 1
        %v807 = vrot.slane %v562, 1
        %v808 = vsel %vm468, %v806, %v807
        %v826 = vunpack.c.l.b16 %v788
        %v827 = vunpack.c.l.b16 %v789
        %v828 = vunpack.c.l.b16 %v790
        %v829 = vunpack.c.l.b16 %v791
        %v830 = vunpack.c.l.b16 %v792
        %v831 = vunpack.c.l.b16 %v793
        %v832 = vunpack.c.l.b16 %v794
        %v833 = vunpack.c.l.b16 %v795
        %v834 = vunpack.c.l.b16 %v796
        %v835 = vunpack.c.l.b16 %v797
        %v836 = vunpack.c.l.b16 %v798
        %v837 = vunpack.c.l.b16 %v799
        %v838 = vunpack.c.l.b16 %v800
        %v839 = vunpack.c.l.b16 %v801
        %v840 = vunpack.c.l.b16 %v802
        %v841 = vunpack.c.l.b16 %v803
        %v842 = vpack.c.b16 %v827, %v826
        %v843 = vpack.c.b16 %v829, %v828
        %v844 = vpack.c.b16 %v831, %v830
        %v845 = vpack.c.b16 %v833, %v832
        %v846 = vpack.c.b16 %v835, %v834
        %v847 = vpack.c.b16 %v837, %v836
        %v848 = vpack.c.b16 %v839, %v838
        %v849 = vpack.c.b16 %v841, %v840
        %858 = vmatprep.subr.bf16.mxu0 0
        %859 = vmatpush1.bf16.msra.mxu0 %v842
        %860 = vmatprep.subr.bf16.mxu0 0
        %861 = vmatpush1.bf16.msra.mxu0 %v843
        %862 = vmatprep.subr.bf16.mxu0 0
        %863 = vmatpush1.bf16.msra.mxu0 %v844
        %864 = vmatprep.subr.bf16.mxu0 0
        %865 = vmatpush1.bf16.msra.mxu0 %v845
        %866 = vmatprep.subr.bf16.mxu0 0
        %867 = vmatpush1.bf16.msra.mxu0 %v846
        %868 = vmatprep.subr.bf16.mxu0 0
        %869 = vmatpush1.bf16.msra.mxu0 %v847
        %870 = vmatprep.subr.bf16.mxu0 0
        %871 = vmatpush1.bf16.msra.mxu0 %v848
        %872 = vmatprep.subr.bf16.mxu0 0
        %873 = vmatpush1.bf16.msra.mxu0 %v849
        %874 = vmatprep.subr.bf16.mxu0 0
        %875 = vmatpush1.bf16.msra.mxu0 0
        %876 = vmatprep.subr.bf16.mxu0 0
        %877 = vmatpush1.bf16.msra.mxu0 0
        %878 = vmatprep.subr.bf16.mxu0 0
        %879 = vmatpush1.bf16.msra.mxu0 0
        %880 = vmatprep.subr.bf16.mxu0 0
        %881 = vmatpush1.bf16.msra.mxu0 0
        %882 = vmatprep.subr.bf16.mxu0 0
        %883 = vmatpush1.bf16.msra.mxu0 0
        %884 = vmatprep.subr.bf16.mxu0 0
        %885 = vmatpush1.bf16.msra.mxu0 0
        %886 = vmatprep.subr.bf16.mxu0 0
        %887 = vmatpush1.bf16.msra.mxu0 0
        %888 = vmatprep.subr.bf16.mxu0 0
        %889 = vmatpush1.bf16.msra.mxu0 0
        %890 = vmatprep.mubr.bf16.mxu0 0
        %891 = vmatmul.mubr.bf16.gmra.mrb[0].mxu0 %v808
        %v892 = vpop.f32.mrb[0].mxu0
        %v893 = vadd.f32 0.0, %v892
        %v894 = vpop.f32.mrb[0].mxu0
        %v895 = vpop.f32.mrb[0].mxu0
        %v896 = vadd.f32 0.0, %v895
        %v897 = vpop.f32.mrb[0].mxu0
        %898 = vdwg.mxu0
        %v899 = vadd.f32 %v781, %v893
        %v900 = vadd.f32 %v784, %v896
        %v901 = vlaneseq
        %v902 = vshrl.u32 %v901, 7
        %v903 = vsub.s32 0, %v902
        %v904 = vrot.slane %v268, %v903
        %v905 = vmul.f32 %v899, %v904
        %v906 = vmul.f32 %v900, %v904
        %v907 = vlaneseq
        %v908 = vshrl.u32 %v907, 7
        %v909 = vsub.s32 0, %v908
        %v910 = vrot.slane %v269, %v909
        %v911 = vadd.f32 %v905, %v910
        %v912 = vadd.f32 %v906, %v910
        %v913 = vmax.f32 %v911, 0.0
        %v914 = vmax.f32 %v912, 0.0
        %915 = vst [vmem:[%s257] sm:$0xff] %v913
        %916 = vst [vmem:[%s257 + $0x8] sm:$0xff] %v914
        %s917 = sand.u32 %s120, 1
        %s918 = scalar_lea.sflag [#allocation6], %s917
        %s919 = sand.u32 %s120, 1
        %s920 = smul.addr %s919, 16
        %s921 = scalar_lea.vmem [#allocation12], %s920
        // Predicated region
        $region53: #{tpu_custom_call.1} parent=35 // pred_check
          %p922 = pneg %p130
        $region54: #{tpu_custom_call.1} parent=35 // pred_check_branch
          %924 = sbr.rel (%p922) target = $region56
        $region55: #{tpu_custom_call.1} parent=35 // pred_region
          %s926 = ssub.s32 256, 256
          %927 = vsyncadd %s918, %s926
          %s928 = smul.addr %s23, 2
          %s929 = smul.addr %s928, 128
          %s930 = scalar_lea.hbm %s4, %s929
          %s931 = sshll.u32 %s921, 4
          %s932 = int_to_ptr.vmem [resolvable:$true] %s931
          %937 = dma.vmem_to_hbm [thread:$0]  %s932, 256, %s930, %s918, 128, 128, 8
        $region56: #{tpu_custom_call.1} parent=35 // pred_fallthru
          _
      $region36: #{tpu_custom_call.1} parent=5 // pred_fallthru
        _
      %p938 = scmp.le.s32.totalorder 2, %s18
      // Predicated region
      $region57: #{tpu_custom_call.1} parent=5 // pred_check
        %p939 = pneg %p938
      $region58: #{tpu_custom_call.1} parent=5 // pred_check_branch
        %941 = sbr.rel (%p939) target = $region60
      $region59: #{tpu_custom_call.1} parent=5 // pred_region
        %s942 = ssub.s32 %s18, 2
        // Predicated region
        $region61: #{tpu_custom_call.1} parent=59 // pred_check
          %p943 = pneg %p136
        $region62: #{tpu_custom_call.1} parent=59 // pred_check_branch
          %945 = sbr.rel (%p943) target = $region64
        $region63: #{tpu_custom_call.1} parent=59 // pred_region
          %s946 = sand.u32 %s121, 1
          %s947 = scalar_lea.sflag [#allocation6], %s946
          %s948 = sand.u32 %s121, 1
          %s949 = smul.addr %s948, 16
          %s950 = scalar_lea.vmem [#allocation12], %s949
          %951 = dma.done %s947, 256
        $region64: #{tpu_custom_call.1} parent=59 // pred_fallthru
          _
      $region60: #{tpu_custom_call.1} parent=5 // pred_fallthru
        _
    $region6: #{tpu_custom_call.1} parent=1 // loop_footer
      %s22 = sadd.s32 1, %s18
    $region7: #{tpu_custom_call.1} parent=1 // loop_footer_branch
      %17 = sbr.rel target = $region3
    $region8: #{tpu_custom_call.1} parent=1 // loop_exit
      _
    %952 = vsyncpa [#allocation5], 1
    %s953 = scalar_lea.sflag [#allocation5], 1
    %954 = vsyncpa %s953, 1
    %955 = vsyncpa [#allocation8], 1
    %956 = vsyncpa [#allocation11], 1
    %957 = vsyncpa [#allocation6], 1
    %s958 = scalar_lea.sflag [#allocation6], 1
    %959 = vsyncpa %s958, 1

</llo_original>
